<compile_context>
chip_gen: v7x
topology: tpu7x:2x2x1
jax: 0.10.0
libtpu: 0.0.40
codegen_flags: <defaults>
</compile_context>

<pallas_src>
import functools

import jax
import jax.numpy as jnp
from jax.experimental import pallas as pl
from jax.experimental.pallas import tpu as pltpu


_MAX_ROW_TILE = 1024


def _hw_config():
    """Returns (num_core_splits, buf_budget_bytes, vmem_limit_bytes)."""
    kind = ""
    try:
        kind = jax.devices()[0].device_kind.lower()
    except Exception:
        pass
    vmem_cap = None
    try:
        vmem_cap = int(pltpu.get_tpu_info().vmem_capacity_bytes)
    except Exception:
        pass
    is_two_core = "v7" in kind
    small_vmem = is_two_core or (vmem_cap is not None and vmem_cap <= 96 * 1024 * 1024)
    if small_vmem:
        # v7x: 64 MiB physical per TC -> keep double-buffer budget tight.
        return (2 if is_two_core else 1), 20 * 1024 * 1024, 40 * 1024 * 1024
    # v5e / v6e: 128 MiB physical -> keep row blocks big (fewer grid steps).
    return (2 if is_two_core else 1), 48 * 1024 * 1024, 96 * 1024 * 1024


def _choose_row_tile(n_rows, v, w, g, inp_itemsize, minp_itemsize, buf_budget):
    """Dtype- and lane-padding-aware row tile, multiple of 32, <= 1024."""
    pad128 = lambda x: ((x + 127) // 128) * 128
    per_row = (pad128(v) * inp_itemsize          # logits tile
               + pad128(w) * minp_itemsize       # match_input tile
               + pad128(g + 1) * 4               # packed int32 indices (128-lane padded)
               + pad128(g + 1) * 4)              # packed f32 masks   (128-lane padded)
    t = buf_budget // max(2 * per_row, 1)        # double-buffered input windows
    t = int(max(32, min(_MAX_ROW_TILE, (t // 32) * 32)))
    if n_rows <= t:
        return int(n_rows)                       # one block spans the full row dim
    return t


# ---------------------------------------------------------------------------
# Fused kernel: LM NLL loss + pointer-match loss over the same row blocks.
# Accumulator lanes: [lm_num, lm_den, match_num, match_cnt]
# ---------------------------------------------------------------------------
def _fused_loss_kernel(inp_ref, minp_ref, idx_ref, mskf_ref, acc_ref,
                       *, gold_num, n_rows, row_tile, blocks_per_core):
    i = pl.program_id(1)

    @pl.when(i == 0)
    def _():
        acc_ref[...] = jnp.zeros_like(acc_ref)

    # Tail / duplicated-block masking against the true row count, derived from
    # the UNclamped global block index (the index_map clamps, we do not).
    block_idx = pl.program_id(0) * blocks_per_core + i
    row0 = block_idx * row_tile
    local_row = jax.lax.broadcasted_iota(jnp.int32, (row_tile, 1), 0)
    row_valid = (row0 + local_row) < n_rows                       # (TN, 1) bool

    idx = idx_ref[...]                                            # (TN, 1+G) i32
    mskf = jnp.where(row_valid, mskf_ref[...], 0.0)               # (TN, 1+G) f32

    # ----- language-model NLL: sum(-inp[r, tgt[r]] * msk[r]), sum(msk) ------
    inp = inp_ref[...]                                            # (TN, V), source dtype
    tgt = idx[:, 0:1]                                             # (TN, 1)
    msk = mskf[:, 0:1]                                            # (TN, 1)
    vidx = jax.lax.broadcasted_iota(jnp.int32, (1, inp.shape[1]), 1)
    zero = jnp.zeros((), dtype=inp.dtype)
    # One nonzero per row -> reducing in the source dtype is exact; tail rows
    # are masked on the reduced column (select, so NaN/garbage cannot leak).
    gathered = jnp.sum(jnp.where(vidx == tgt, inp, zero),
                       axis=1, keepdims=True).astype(jnp.float32)
    gathered = jnp.where(row_valid, gathered, 0.0)
    lm_num = jnp.sum(-gathered * msk)
    lm_den = jnp.sum(msk)

    # ----- pointer-match loss ------------------------------------------------
    minp = minp_ref[...].astype(jnp.float32)                      # (TN, W), small
    mmsk = mskf[:, 1:]                                            # (TN, G)
    midx = idx[:, 1:] - 1                                         # (TN, G): padded index - 1
    widx = jax.lax.broadcasted_iota(jnp.int32, (1, minp.shape[1]), 1)

    # Build one weight matrix with G compare/select-adds (pure VALU); a padded
    # index of 0 maps to -1 which never matches, i.e. the F.pad zero column of
    # the reference. Then a single cross-lane reduction.
    w = jnp.zeros_like(minp)
    for g in range(gold_num):                                     # G is tiny & static
        w = w + jnp.where(widx == midx[:, g:g + 1], mmsk[:, g:g + 1], 0.0)
    m_num = jnp.sum(jnp.where(w != 0.0, -minp * w, 0.0))
    m_cnt = jnp.sum((jnp.sum(mmsk, axis=1, keepdims=True) != 0.0)
                    .astype(jnp.float32))

    # ----- single resident accumulator block ---------------------------------
    lane = jax.lax.broadcasted_iota(jnp.int32, (1, 1, 4), 2)
    acc_ref[...] += (jnp.where(lane == 0, lm_num, 0.0)
                     + jnp.where(lane == 1, lm_den, 0.0)
                     + jnp.where(lane == 2, m_num, 0.0)
                     + jnp.where(lane == 3, m_cnt, 0.0))


# ---------------------------------------------------------------------------
# Wrapper reproducing LanguageModelMatchCriterion.forward
# ---------------------------------------------------------------------------
def language_model_match_criterion(inp, target, mask,
                                   match_input, match_target, match_mask,
                                   *, match_weight, gold_num, row_tile=None):
    B, L, V = inp.shape
    Bm, Lm, W = match_input.shape
    G = gold_num

    num_splits, buf_budget, vmem_limit = _hw_config()

    # No dtype cast on the big tensors here: the kernel stays in source dtype.
    inp2 = inp.reshape(-1, V)
    minp2 = match_input.reshape(-1, W)
    tgt2 = target[:, :L].reshape(-1, 1).astype(jnp.int32)
    mtgt2 = match_target[:, :Lm].reshape(-1, G).astype(jnp.int32)
    msk2 = mask[:, :L].reshape(-1, 1).astype(jnp.float32)
    mmsk2 = match_mask[:, :Lm].reshape(-1, G).astype(jnp.float32)

    N = inp2.shape[0]
    # Fusion requires both losses to cover the same (batch, seq) rows, which is
    # what the model produces.
    assert minp2.shape[0] == N, "fused kernel expects matching (batch, seq) rows"

    # Pack the narrow per-row tensors: 6 input DMAs per step -> 4.
    idx_pack = jnp.concatenate([tgt2, mtgt2], axis=1)             # (N, 1+G) i32
    msk_pack = jnp.concatenate([msk2, mmsk2], axis=1)             # (N, 1+G) f32

    if row_tile is None:
        row_tile = _choose_row_tile(N, V, W, G,
                                    inp2.dtype.itemsize,
                                    minp2.dtype.itemsize,
                                    buf_budget)
    else:
        row_tile = int(row_tile)
        row_tile = N if row_tile >= N else max(8, (row_tile // 8) * 8)

    n_blocks = pl.cdiv(N, row_tile)
    bpc = pl.cdiv(n_blocks, num_splits)

    def row_map(c, i):
        # Clamp so grid slots past the last real block re-read it; those rows
        # are fully masked out in-kernel via the UNclamped global row index.
        return (jnp.minimum(c * bpc + i, n_blocks - 1), 0)

    acc = pl.pallas_call(
        functools.partial(_fused_loss_kernel, gold_num=G, n_rows=N,
                          row_tile=row_tile, blocks_per_core=bpc),
        out_shape=jax.ShapeDtypeStruct((num_splits, 1, 4), jnp.float32),
        grid_spec=pltpu.PrefetchScalarGridSpec(
            num_scalar_prefetch=0,
            grid=(num_splits, bpc),
            in_specs=[pl.BlockSpec((row_tile, V), row_map),
                      pl.BlockSpec((row_tile, W), row_map),
                      pl.BlockSpec((row_tile, G + 1), row_map),
                      pl.BlockSpec((row_tile, G + 1), row_map)],
            out_specs=pl.BlockSpec((1, 1, 4), lambda c, i: (c, 0, 0))),
        compiler_params=pltpu.CompilerParams(
            dimension_semantics=("parallel", "arbitrary"),
            vmem_limit_bytes=vmem_limit),
    )(inp2, minp2, idx_pack, msk_pack)

    totals = jnp.sum(acc, axis=(0, 1))                            # (4,)
    output = totals[0] / totals[1]
    match_output = totals[2] / totals[3]
    return output, match_weight * match_output


# ---------------------------------------------------------------------------
# Pure-JAX reference (mirrors the PyTorch forward) for verification.
# ---------------------------------------------------------------------------
def _reference(inp, target, mask, match_input, match_target, match_mask,
               *, match_weight, gold_num):
    B, L, V = inp.shape
    t = target[:, :L].reshape(-1)
    m = mask[:, :L].reshape(-1).astype(jnp.float32)
    flat = inp.reshape(-1, V).astype(jnp.float32)
    gathered = jnp.take_along_axis(flat, t[:, None], axis=1)[:, 0]
    output = jnp.sum(-gathered * m) / jnp.sum(m)

    Bm, Lm, W = match_input.shape
    mt = match_target[:, :Lm].reshape(-1, gold_num)
    mm = match_mask[:, :Lm].reshape(-1, gold_num).astype(jnp.float32)
    mi = match_input.reshape(-1, W).astype(jnp.float32)
    mi_pad = jnp.pad(mi, ((0, 0), (1, 0)))
    g = jnp.take_along_axis(mi_pad, mt, axis=1)
    mask_num = jnp.sum((jnp.sum(mm, axis=1) != 0).astype(jnp.float32))
    match_output = jnp.sum(-g * mm) / mask_num
    return output, match_weight * match_output


if __name__ == "__main__":
    # "Parameters" of the module (from opt): deterministic constants.
    MATCH_WEIGHT = 0.5       # opt.pointer_matching_weight
    GOLD_NUM = 4             # opt.match_gold_num

    def make_inputs(key, B, S, V, W, G, dtype=jnp.float32):
        k1, k2, k3, k4, k5, k6 = jax.random.split(key, 6)
        logits = jax.random.normal(k1, (B, S, V), dtype=jnp.float32)
        inp = jax.nn.log_softmax(logits, axis=-1).astype(dtype)
        target = jax.random.randint(k2, (B, S), 0, V, dtype=jnp.int32)
        mask = (jax.random.uniform(k3, (B, S)) > 0.2).astype(jnp.float32)
        match_input = jax.nn.log_softmax(
            jax.random.normal(k4, (B, S, W), dtype=jnp.float32), axis=-1).astype(dtype)
        # match_target indexes the zero-padded word dim [0, W]
        match_target = jax.random.randint(k5, (B, S, G), 0, W + 1, dtype=jnp.int32)
        match_mask = (jax.random.uniform(k6, (B, S, G)) > 0.3).astype(jnp.float32)
        return inp, target, mask, match_input, match_target, match_mask

    key = jax.random.PRNGKey(0)
    k_a, k_b = jax.random.split(key)

    # Case 1: small aligned f32 shapes; auto row_tile covers all rows at once.
    args_a = make_inputs(k_a, 2, 8, 32, 16, GOLD_NUM, dtype=jnp.float32)
    out_a, mout_a = language_model_match_criterion(
        *args_a, match_weight=MATCH_WEIGHT, gold_num=GOLD_NUM)
    ref_a, refm_a = _reference(*args_a, match_weight=MATCH_WEIGHT, gold_num=GOLD_NUM)

    # Case 2: bf16 logits, 3*5 = 15 rows with forced row_tile=8 exercises the
    # source-dtype gather path, the cdiv grid, and tail-row masking.
    args_b = make_inputs(k_b, 3, 5, 33, 16, GOLD_NUM, dtype=jnp.bfloat16)
    out_b, mout_b = language_model_match_criterion(
        *args_b, match_weight=MATCH_WEIGHT, gold_num=GOLD_NUM, row_tile=8)
    ref_b, refm_b = _reference(*args_b, match_weight=MATCH_WEIGHT, gold_num=GOLD_NUM)

    for got, want in [(out_a, ref_a), (mout_a, refm_a),
                      (out_b, ref_b), (mout_b, refm_b)]:
        got = jax.block_until_ready(got)
        assert jnp.allclose(got, want, rtol=1e-5, atol=1e-5), (got, want)
    print("KERNEL_OK")
</pallas_src>

<mosaic_0001>
module attributes {stable_mosaic.version = 11 : i64} {
  func.func @_fused_loss_kernel(%arg0: i32, %arg1: i32, %arg2: memref<16x32xf32, #tpu.memory_space<vmem>>, %arg3: memref<16x16xf32, #tpu.memory_space<vmem>>, %arg4: memref<16x5xi32, #tpu.memory_space<vmem>>, %arg5: memref<16x5xf32, #tpu.memory_space<vmem>>, %arg6: memref<1x1x4xf32, #tpu.memory_space<vmem>>) attributes {dimension_semantics = [#tpu.dimension_semantics<parallel>, #tpu.dimension_semantics<arbitrary>], iteration_bounds = array<i64: 1, 1>, scalar_prefetch = 0 : i64, scratch_operands = 0 : i64, tpu.core_type = #tpu.core_type<tc>, window_params = [{transform_indices = @transform_0, window_bounds = array<i64: 16, 32>}, {transform_indices = @transform_1, window_bounds = array<i64: 16, 16>}, {transform_indices = @transform_2, window_bounds = array<i64: 16, 5>}, {transform_indices = @transform_3, window_bounds = array<i64: 16, 5>}, {transform_indices = @transform_4, window_bounds = array<i64: 1, 1, 4>}]} {
    %c0_i32 = arith.constant 0 : i32
    %0 = arith.cmpi eq, %arg1, %c0_i32 : i32
    %1 = arith.extui %0 : i1 to i32
    %c0_i32_0 = arith.constant 0 : i32
    %2 = arith.cmpi ne, %1, %c0_i32_0 : i32
    scf.if %2 {
      %cst_40 = arith.constant 0.000000e+00 : f32
      %136 = vector.broadcast %cst_40 : f32 to vector<1x1x4xf32>
      %c0_41 = arith.constant 0 : index
      %c0_42 = arith.constant 0 : index
      %c0_43 = arith.constant 0 : index
      %137 = vector.load %arg6[%c0_41, %c0_42, %c0_43] : memref<1x1x4xf32, #tpu.memory_space<vmem>>, vector<1x1x4xf32>
      tpu.vector_store %arg6[%c0_41, %c0_42, %c0_43], %136 {strides = array<i32>} : memref<1x1x4xf32, #tpu.memory_space<vmem>>, vector<1x1x4xf32>,
    } else {
    }
    %c1_i32 = arith.constant 1 : i32
    %3 = arith.muli %arg0, %c1_i32 : i32
    %4 = arith.addi %3, %arg1 : i32
    %c16_i32 = arith.constant 16 : i32
    %5 = arith.muli %4, %c16_i32 : i32
    %6 = tpu.iota {dimensions = array<i32: 0>} : vector<16x1xi32>
    %7 = vector.broadcast %5 : i32 to vector<16x1xi32>
    %8 = arith.addi %7, %6 : vector<16x1xi32>
    %c16_i32_1 = arith.constant 16 : i32
    %9 = vector.broadcast %c16_i32_1 : i32 to vector<16x1xi32>
    %10 = arith.cmpi slt, %8, %9 : vector<16x1xi32>
    %c0 = arith.constant 0 : index
    %c0_2 = arith.constant 0 : index
    %11 = vector.load %arg4[%c0, %c0_2] : memref<16x5xi32, #tpu.memory_space<vmem>>, vector<16x5xi32>
    %c0_3 = arith.constant 0 : index
    %c0_4 = arith.constant 0 : index
    %12 = vector.load %arg5[%c0_3, %c0_4] : memref<16x5xf32, #tpu.memory_space<vmem>>, vector<16x5xf32>
    %cst = arith.constant 0.000000e+00 : f32
    %13 = vector.shape_cast %10 : vector<16x1xi1> to vector<16x1xi1>
    %14 = vector.broadcast %13 : vector<16x1xi1> to vector<16x5xi1>
    %15 = vector.broadcast %cst : f32 to vector<16x5xf32>
    %16 = arith.select %14, %12, %15 : vector<16x5xi1>, vector<16x5xf32>
    %c0_5 = arith.constant 0 : index
    %c0_6 = arith.constant 0 : index
    %17 = vector.load %arg2[%c0_5, %c0_6] : memref<16x32xf32, #tpu.memory_space<vmem>>, vector<16x32xf32>
    %18 = vector.extract_strided_slice %11 {offsets = [0, 0], sizes = [16, 1], strides = [1, 1]} : vector<16x5xi32> to vector<16x1xi32>
    %19 = vector.extract_strided_slice %16 {offsets = [0, 0], sizes = [16, 1], strides = [1, 1]} : vector<16x5xf32> to vector<16x1xf32>
    %20 = tpu.iota {dimensions = array<i32: 1>} : vector<1x32xi32>
    %21 = vector.broadcast %20 : vector<1x32xi32> to vector<16x32xi32>
    %22 = vector.broadcast %18 : vector<16x1xi32> to vector<16x32xi32>
    %23 = arith.cmpi eq, %21, %22 : vector<16x32xi32>
    %cst_7 = arith.constant 0.000000e+00 : f32
    %24 = vector.broadcast %cst_7 : f32 to vector<16x32xf32>
    %25 = arith.select %23, %17, %24 : vector<16x32xi1>, vector<16x32xf32>
    %cst_8 = arith.constant dense<0.000000e+00> : vector<16xf32>
    %26 = vector.multi_reduction <add>, %25, %cst_8 [1] : vector<16x32xf32> to vector<16xf32>
    %27 = vector.shape_cast %26 : vector<16xf32> to vector<16x1xf32>
    %cst_9 = arith.constant 0.000000e+00 : f32
    %28 = vector.broadcast %cst_9 : f32 to vector<16x1xf32>
    %29 = arith.select %10, %27, %28 : vector<16x1xi1>, vector<16x1xf32>
    %cst_10 = arith.constant 0.000000e+00 : f32
    %30 = vector.broadcast %cst_10 : f32 to vector<16x1xf32>
    %31 = arith.subf %30, %29 : vector<16x1xf32>
    %32 = arith.mulf %31, %19 : vector<16x1xf32>
    %33 = vector.shape_cast %32 : vector<16x1xf32> to vector<1x16x1xf32>
    %cst_11 = arith.constant dense<0.000000e+00> : vector<1xf32>
    %34 = vector.multi_reduction <add>, %33, %cst_11 [1, 2] : vector<1x16x1xf32> to vector<1xf32>
    %35 = vector.shape_cast %34 : vector<1xf32> to vector<1x1x1xf32>
    %36 = vector.extract %35[0, 0, 0] : f32 from vector<1x1x1xf32>
    %37 = vector.shape_cast %19 : vector<16x1xf32> to vector<1x16x1xf32>
    %cst_12 = arith.constant dense<0.000000e+00> : vector<1xf32>
    %38 = vector.multi_reduction <add>, %37, %cst_12 [1, 2] : vector<1x16x1xf32> to vector<1xf32>
    %39 = vector.shape_cast %38 : vector<1xf32> to vector<1x1x1xf32>
    %40 = vector.extract %39[0, 0, 0] : f32 from vector<1x1x1xf32>
    %c0_13 = arith.constant 0 : index
    %c0_14 = arith.constant 0 : index
    %41 = vector.load %arg3[%c0_13, %c0_14] : memref<16x16xf32, #tpu.memory_space<vmem>>, vector<16x16xf32>
    %42 = vector.extract_strided_slice %16 {offsets = [0, 1], sizes = [16, 4], strides = [1, 1]} : vector<16x5xf32> to vector<16x4xf32>
    %43 = vector.extract_strided_slice %11 {offsets = [0, 1], sizes = [16, 4], strides = [1, 1]} : vector<16x5xi32> to vector<16x4xi32>
    %c1_i32_15 = arith.constant 1 : i32
    %44 = vector.broadcast %c1_i32_15 : i32 to vector<16x4xi32>
    %45 = arith.subi %43, %44 : vector<16x4xi32>
    %46 = tpu.iota {dimensions = array<i32: 1>} : vector<1x16xi32>
    %cst_16 = arith.constant 0.000000e+00 : f32
    %47 = vector.broadcast %cst_16 : f32 to vector<16x16xf32>
    %48 = vector.extract_strided_slice %45 {offsets = [0, 0], sizes = [16, 1], strides = [1, 1]} : vector<16x4xi32> to vector<16x1xi32>
    %49 = vector.broadcast %46 : vector<1x16xi32> to vector<16x16xi32>
    %50 = vector.broadcast %48 : vector<16x1xi32> to vector<16x16xi32>
    %51 = arith.cmpi eq, %49, %50 : vector<16x16xi32>
    %52 = vector.extract_strided_slice %42 {offsets = [0, 0], sizes = [16, 1], strides = [1, 1]} : vector<16x4xf32> to vector<16x1xf32>
    %cst_17 = arith.constant 0.000000e+00 : f32
    %53 = vector.shape_cast %52 : vector<16x1xf32> to vector<16x1xf32>
    %54 = vector.broadcast %53 : vector<16x1xf32> to vector<16x16xf32>
    %55 = vector.broadcast %cst_17 : f32 to vector<16x16xf32>
    %56 = arith.select %51, %54, %55 : vector<16x16xi1>, vector<16x16xf32>
    %57 = arith.addf %47, %56 : vector<16x16xf32>
    %58 = vector.extract_strided_slice %45 {offsets = [0, 1], sizes = [16, 1], strides = [1, 1]} : vector<16x4xi32> to vector<16x1xi32>
    %59 = vector.broadcast %46 : vector<1x16xi32> to vector<16x16xi32>
    %60 = vector.broadcast %58 : vector<16x1xi32> to vector<16x16xi32>
    %61 = arith.cmpi eq, %59, %60 : vector<16x16xi32>
    %62 = vector.extract_strided_slice %42 {offsets = [0, 1], sizes = [16, 1], strides = [1, 1]} : vector<16x4xf32> to vector<16x1xf32>
    %cst_18 = arith.constant 0.000000e+00 : f32
    %63 = vector.shape_cast %62 : vector<16x1xf32> to vector<16x1xf32>
    %64 = vector.broadcast %63 : vector<16x1xf32> to vector<16x16xf32>
    %65 = vector.broadcast %cst_18 : f32 to vector<16x16xf32>
    %66 = arith.select %61, %64, %65 : vector<16x16xi1>, vector<16x16xf32>
    %67 = arith.addf %57, %66 : vector<16x16xf32>
    %68 = vector.extract_strided_slice %45 {offsets = [0, 2], sizes = [16, 1], strides = [1, 1]} : vector<16x4xi32> to vector<16x1xi32>
    %69 = vector.broadcast %46 : vector<1x16xi32> to vector<16x16xi32>
    %70 = vector.broadcast %68 : vector<16x1xi32> to vector<16x16xi32>
    %71 = arith.cmpi eq, %69, %70 : vector<16x16xi32>
    %72 = vector.extract_strided_slice %42 {offsets = [0, 2], sizes = [16, 1], strides = [1, 1]} : vector<16x4xf32> to vector<16x1xf32>
    %cst_19 = arith.constant 0.000000e+00 : f32
    %73 = vector.shape_cast %72 : vector<16x1xf32> to vector<16x1xf32>
    %74 = vector.broadcast %73 : vector<16x1xf32> to vector<16x16xf32>
    %75 = vector.broadcast %cst_19 : f32 to vector<16x16xf32>
    %76 = arith.select %71, %74, %75 : vector<16x16xi1>, vector<16x16xf32>
    %77 = arith.addf %67, %76 : vector<16x16xf32>
    %78 = vector.extract_strided_slice %45 {offsets = [0, 3], sizes = [16, 1], strides = [1, 1]} : vector<16x4xi32> to vector<16x1xi32>
    %79 = vector.broadcast %46 : vector<1x16xi32> to vector<16x16xi32>
    %80 = vector.broadcast %78 : vector<16x1xi32> to vector<16x16xi32>
    %81 = arith.cmpi eq, %79, %80 : vector<16x16xi32>
    %82 = vector.extract_strided_slice %42 {offsets = [0, 3], sizes = [16, 1], strides = [1, 1]} : vector<16x4xf32> to vector<16x1xf32>
    %cst_20 = arith.constant 0.000000e+00 : f32
    %83 = vector.shape_cast %82 : vector<16x1xf32> to vector<16x1xf32>
    %84 = vector.broadcast %83 : vector<16x1xf32> to vector<16x16xf32>
    %85 = vector.broadcast %cst_20 : f32 to vector<16x16xf32>
    %86 = arith.select %81, %84, %85 : vector<16x16xi1>, vector<16x16xf32>
    %87 = arith.addf %77, %86 : vector<16x16xf32>
    %cst_21 = arith.constant 0.000000e+00 : f32
    %88 = vector.broadcast %cst_21 : f32 to vector<16x16xf32>
    %89 = arith.cmpf one, %87, %88 : vector<16x16xf32>
    %cst_22 = arith.constant 0.000000e+00 : f32
    %90 = vector.broadcast %cst_22 : f32 to vector<16x16xf32>
    %91 = arith.subf %90, %41 : vector<16x16xf32>
    %92 = arith.mulf %91, %87 : vector<16x16xf32>
    %cst_23 = arith.constant 0.000000e+00 : f32
    %93 = vector.broadcast %cst_23 : f32 to vector<16x16xf32>
    %94 = arith.select %89, %92, %93 : vector<16x16xi1>, vector<16x16xf32>
    %95 = vector.shape_cast %94 : vector<16x16xf32> to vector<1x16x16xf32>
    %cst_24 = arith.constant dense<0.000000e+00> : vector<1xf32>
    %96 = vector.multi_reduction <add>, %95, %cst_24 [1, 2] : vector<1x16x16xf32> to vector<1xf32>
    %97 = vector.shape_cast %96 : vector<1xf32> to vector<1x1x1xf32>
    %98 = vector.extract %97[0, 0, 0] : f32 from vector<1x1x1xf32>
    %cst_25 = arith.constant dense<0.000000e+00> : vector<16xf32>
    %99 = vector.multi_reduction <add>, %42, %cst_25 [1] : vector<16x4xf32> to vector<16xf32>
    %100 = vector.shape_cast %99 : vector<16xf32> to vector<16x1xf32>
    %cst_26 = arith.constant 0.000000e+00 : f32
    %101 = vector.broadcast %cst_26 : f32 to vector<16x1xf32>
    %102 = arith.cmpf one, %100, %101 : vector<16x1xf32>
    %103 = arith.extui %102 : vector<16x1xi1> to vector<16x1xi32>
    %104 = arith.sitofp %103 : vector<16x1xi32> to vector<16x1xf32>
    %105 = vector.shape_cast %104 : vector<16x1xf32> to vector<1x16x1xf32>
    %cst_27 = arith.constant dense<0.000000e+00> : vector<1xf32>
    %106 = vector.multi_reduction <add>, %105, %cst_27 [1, 2] : vector<1x16x1xf32> to vector<1xf32>
    %107 = vector.shape_cast %106 : vector<1xf32> to vector<1x1x1xf32>
    %108 = vector.extract %107[0, 0, 0] : f32 from vector<1x1x1xf32>
    %109 = tpu.iota {dimensions = array<i32: 2>} : vector<1x1x4xi32>
    %c0_28 = arith.constant 0 : index
    %c0_29 = arith.constant 0 : index
    %c0_30 = arith.constant 0 : index
    %110 = vector.load %arg6[%c0_28, %c0_29, %c0_30] : memref<1x1x4xf32, #tpu.memory_space<vmem>>, vector<1x1x4xf32>
    %c0_i32_31 = arith.constant 0 : i32
    %111 = vector.broadcast %c0_i32_31 : i32 to vector<1x1x4xi32>
    %112 = arith.cmpi eq, %109, %111 : vector<1x1x4xi32>
    %cst_32 = arith.constant 0.000000e+00 : f32
    %113 = vector.broadcast %36 : f32 to vector<1x1x4xf32>
    %114 = vector.broadcast %cst_32 : f32 to vector<1x1x4xf32>
    %115 = arith.select %112, %113, %114 : vector<1x1x4xi1>, vector<1x1x4xf32>
    %c1_i32_33 = arith.constant 1 : i32
    %116 = vector.broadcast %c1_i32_33 : i32 to vector<1x1x4xi32>
    %117 = arith.cmpi eq, %109, %116 : vector<1x1x4xi32>
    %cst_34 = arith.constant 0.000000e+00 : f32
    %118 = vector.broadcast %40 : f32 to vector<1x1x4xf32>
    %119 = vector.broadcast %cst_34 : f32 to vector<1x1x4xf32>
    %120 = arith.select %117, %118, %119 : vector<1x1x4xi1>, vector<1x1x4xf32>
    %121 = arith.addf %115, %120 : vector<1x1x4xf32>
    %c2_i32 = arith.constant 2 : i32
    %122 = vector.broadcast %c2_i32 : i32 to vector<1x1x4xi32>
    %123 = arith.cmpi eq, %109, %122 : vector<1x1x4xi32>
    %cst_35 = arith.constant 0.000000e+00 : f32
    %124 = vector.broadcast %98 : f32 to vector<1x1x4xf32>
    %125 = vector.broadcast %cst_35 : f32 to vector<1x1x4xf32>
    %126 = arith.select %123, %124, %125 : vector<1x1x4xi1>, vector<1x1x4xf32>
    %127 = arith.addf %121, %126 : vector<1x1x4xf32>
    %c3_i32 = arith.constant 3 : i32
    %128 = vector.broadcast %c3_i32 : i32 to vector<1x1x4xi32>
    %129 = arith.cmpi eq, %109, %128 : vector<1x1x4xi32>
    %cst_36 = arith.constant 0.000000e+00 : f32
    %130 = vector.broadcast %108 : f32 to vector<1x1x4xf32>
    %131 = vector.broadcast %cst_36 : f32 to vector<1x1x4xf32>
    %132 = arith.select %129, %130, %131 : vector<1x1x4xi1>, vector<1x1x4xf32>
    %133 = arith.addf %127, %132 : vector<1x1x4xf32>
    %134 = arith.addf %110, %133 : vector<1x1x4xf32>
    %c0_37 = arith.constant 0 : index
    %c0_38 = arith.constant 0 : index
    %c0_39 = arith.constant 0 : index
    %135 = vector.load %arg6[%c0_37, %c0_38, %c0_39] : memref<1x1x4xf32, #tpu.memory_space<vmem>>, vector<1x1x4xf32>
    tpu.vector_store %arg6[%c0_37, %c0_38, %c0_39], %134 {strides = array<i32>} : memref<1x1x4xf32, #tpu.memory_space<vmem>>, vector<1x1x4xf32>,
    return
  }
  func.func @transform_0(%arg0: i32, %arg1: i32) -> (i32, i32) {
    %c1_i32 = arith.constant 1 : i32
    %0 = arith.muli %arg0, %c1_i32 : i32
    %1 = arith.addi %0, %arg1 : i32
    %c0_i32 = arith.constant 0 : i32
    %2 = arith.minsi %1, %c0_i32 : i32
    %c0_i32_0 = arith.constant 0 : i32
    %c0_i32_1 = arith.constant 0 : i32
    return %2, %c0_i32_0 : i32, i32
  }
  func.func @transform_1(%arg0: i32, %arg1: i32) -> (i32, i32) {
    %c1_i32 = arith.constant 1 : i32
    %0 = arith.muli %arg0, %c1_i32 : i32
    %1 = arith.addi %0, %arg1 : i32
    %c0_i32 = arith.constant 0 : i32
    %2 = arith.minsi %1, %c0_i32 : i32
    %c0_i32_0 = arith.constant 0 : i32
    %c0_i32_1 = arith.constant 0 : i32
    return %2, %c0_i32_0 : i32, i32
  }
  func.func @transform_2(%arg0: i32, %arg1: i32) -> (i32, i32) {
    %c1_i32 = arith.constant 1 : i32
    %0 = arith.muli %arg0, %c1_i32 : i32
    %1 = arith.addi %0, %arg1 : i32
    %c0_i32 = arith.constant 0 : i32
    %2 = arith.minsi %1, %c0_i32 : i32
    %c0_i32_0 = arith.constant 0 : i32
    %c0_i32_1 = arith.constant 0 : i32
    return %2, %c0_i32_0 : i32, i32
  }
  func.func @transform_3(%arg0: i32, %arg1: i32) -> (i32, i32) {
    %c1_i32 = arith.constant 1 : i32
    %0 = arith.muli %arg0, %c1_i32 : i32
    %1 = arith.addi %0, %arg1 : i32
    %c0_i32 = arith.constant 0 : i32
    %2 = arith.minsi %1, %c0_i32 : i32
    %c0_i32_0 = arith.constant 0 : i32
    %c0_i32_1 = arith.constant 0 : i32
    return %2, %c0_i32_0 : i32, i32
  }
  func.func @transform_4(%arg0: i32, %arg1: i32) -> (i32, i32, i32) {
    %c0_i32 = arith.constant 0 : i32
    %c0_i32_0 = arith.constant 0 : i32
    %c0_i32_1 = arith.constant 0 : i32
    return %arg0, %c0_i32, %c0_i32_0 : i32, i32, i32
  }
}

</mosaic_0001>

<llo_original>
// kernel: tpu_custom_call.1
$region0: #{tpu_custom_call.1}
  #allocation0 [shape = 'u32[]', space=smem, size = 0x4, offset = 0x4, fixed_abs, tag = 'smem constant byte address 0x4 - core index']
  #allocation1 [shape = 'u32[144,128]{1,0:T(1,128)}', space=vmem, size = 0x12000, scoped, tag = 'internal scratch']
  %s0 = inlined_call_operand.hbm [shape: f32[16,32], index: 0, kind: input, shape index: {}]
  %s1 = inlined_call_operand.hbm [shape: f32[16,16], index: 1, kind: input, shape index: {}]
  %s2 = inlined_call_operand.hbm [shape: s32[16,5], index: 2, kind: input, shape index: {}]
  %s3 = inlined_call_operand.hbm [shape: f32[16,5], index: 3, kind: input, shape index: {}]
  %s4 = inlined_call_operand.hbm [shape: f32[1,1,4], index: 4, kind: output, shape index: {}]
  %s5 = sld [smem:[#allocation0]]
  $region46: #{tpu_custom_call.1} parent=0
    _
  %s7 = ssub.s32 1, %s5
  %s8 = scalar_select 0, %s7, %s5
  $region1: #{tpu_custom_call.1} parent=0
    #allocation2 [shape = 'u8[8192]{0}', space=vmem, size = 0x2000, scoped, tag = 'input window, operand 0, single buffered']
    #allocation3 [shape = 's32[1]{0}', space=sflag, size = 0x4, scoped, tag = 'scoped memory for tpu_custom_call.1']
    #allocation4 [shape = 's32[1]{0}', space=sflag, size = 0x4, scoped, tag = 'scoped memory for tpu_custom_call.1']
    #allocation5 [shape = 'u8[8192]{0}', space=vmem, size = 0x2000, scoped, tag = 'input window, operand 1, single buffered']
    #allocation6 [shape = 's32[1]{0}', space=sflag, size = 0x4, scoped, tag = 'scoped memory for tpu_custom_call.1']
    #allocation7 [shape = 'u8[8192]{0}', space=vmem, size = 0x2000, scoped, tag = 'input window, operand 2, single buffered']
    #allocation8 [shape = 'u8[8192]{0}', space=vmem, size = 0x2000, scoped, tag = 'input window, operand 3, single buffered']
    #allocation9 [shape = 's32[1]{0}', space=sflag, size = 0x4, scoped, tag = 'scoped memory for tpu_custom_call.1']
    #allocation10 [shape = 'u8[512]{0}', space=vmem, size = 0x400, scoped, tag = 'output window, operand 0, single buffered']
    %9 = vsyncpa [#allocation3], 0
    %10 = vsyncpa [#allocation6], 0
    %11 = vsyncpa [#allocation9], 0
    %12 = vsyncpa [#allocation4], 0
    // Predicated region
    $region2: #{tpu_custom_call.1} parent=1 // pred_check
      _
    $region3: #{tpu_custom_call.1} parent=1 // pred_check_branch
      %14 = sbr.rel (0) target = $region5
    $region4: #{tpu_custom_call.1} parent=1 // pred_region
      %s15 = sadd.s32 0, 0
      %p16 = scmp.lt.s32.totalorder %s15, 0
      %s17 = scalar_select %p16, %s15, 0
      %s18 = smul.u32 2, %s17
      %s20 = ssub.s32 256, 256
      %21 = vsyncadd [#allocation3], %s20
      %s22 = smul.addr %s18, 128
      %s23 = scalar_lea.hbm %s0, %s22
      %s24 = sshll.u32 [#allocation2], 4
      %s25 = int_to_ptr.vmem [resolvable:$true] %s24
      %30 = dma.hbm_to_vmem [thread:$0]  %s23, 256, %s25, [#allocation3], 128, 128, 8
    $region5: #{tpu_custom_call.1} parent=1 // pred_fallthru
      _
    // Predicated region
    $region6: #{tpu_custom_call.1} parent=1 // pred_check
      _
    $region7: #{tpu_custom_call.1} parent=1 // pred_check_branch
      %32 = sbr.rel (0) target = $region9
    $region8: #{tpu_custom_call.1} parent=1 // pred_region
      %s33 = sadd.s32 0, 0
      %p34 = scmp.lt.s32.totalorder %s33, 0
      %s35 = scalar_select %p34, %s33, 0
      %s36 = smul.u32 2, %s35
      %s38 = ssub.s32 256, 256
      %39 = vsyncadd [#allocation6], %s38
      %s40 = smul.addr %s36, 128
      %s41 = scalar_lea.hbm %s1, %s40
      %s42 = sshll.u32 [#allocation5], 4
      %s43 = int_to_ptr.vmem [resolvable:$true] %s42
      %48 = dma.hbm_to_vmem [thread:$0]  %s41, 256, %s43, [#allocation6], 128, 128, 8
    $region9: #{tpu_custom_call.1} parent=1 // pred_fallthru
      _
    // Predicated region
    $region10: #{tpu_custom_call.1} parent=1 // pred_check
      _
    $region11: #{tpu_custom_call.1} parent=1 // pred_check_branch
      %50 = sbr.rel (0) target = $region13
    $region12: #{tpu_custom_call.1} parent=1 // pred_region
      %s51 = sadd.s32 0, 0
      %p52 = scmp.lt.s32.totalorder %s51, 0
      %s53 = scalar_select %p52, %s51, 0
      %s54 = smul.u32 2, %s53
      %s56 = ssub.s32 256, 256
      %57 = vsyncadd [#allocation6], %s56
      %s58 = smul.addr %s54, 128
      %s59 = scalar_lea.hbm %s2, %s58
      %s60 = sshll.u32 [#allocation7], 4
      %s61 = int_to_ptr.vmem [resolvable:$true] %s60
      %66 = dma.hbm_to_vmem [thread:$0]  %s59, 256, %s61, [#allocation6], 128, 128, 8
    $region13: #{tpu_custom_call.1} parent=1 // pred_fallthru
      _
    // Predicated region
    $region14: #{tpu_custom_call.1} parent=1 // pred_check
      _
    $region15: #{tpu_custom_call.1} parent=1 // pred_check_branch
      %68 = sbr.rel (0) target = $region17
    $region16: #{tpu_custom_call.1} parent=1 // pred_region
      %s69 = sadd.s32 0, 0
      %p70 = scmp.lt.s32.totalorder %s69, 0
      %s71 = scalar_select %p70, %s69, 0
      %s72 = smul.u32 2, %s71
      %s74 = ssub.s32 256, 256
      %75 = vsyncadd [#allocation9], %s74
      %s76 = smul.addr %s72, 128
      %s77 = scalar_lea.hbm %s3, %s76
      %s78 = sshll.u32 [#allocation8], 4
      %s79 = int_to_ptr.vmem [resolvable:$true] %s78
      %84 = dma.hbm_to_vmem [thread:$0]  %s77, 256, %s79, [#allocation9], 128, 128, 8
    $region17: #{tpu_custom_call.1} parent=1 // pred_fallthru
      _
    // Predicated region
    $region18: #{tpu_custom_call.1} parent=1 // pred_check
      _
    $region19: #{tpu_custom_call.1} parent=1 // pred_check_branch
      %86 = sbr.rel (0) target = $region21
    $region20: #{tpu_custom_call.1} parent=1 // pred_region
      %87 = dma.done [#allocation3], 256
    $region21: #{tpu_custom_call.1} parent=1 // pred_fallthru
      _
    // Predicated region
    $region22: #{tpu_custom_call.1} parent=1 // pred_check
      _
    $region23: #{tpu_custom_call.1} parent=1 // pred_check_branch
      %89 = sbr.rel (0) target = $region25
    $region24: #{tpu_custom_call.1} parent=1 // pred_region
      %90 = dma.done [#allocation6], 256
    $region25: #{tpu_custom_call.1} parent=1 // pred_fallthru
      _
    // Predicated region
    $region26: #{tpu_custom_call.1} parent=1 // pred_check
      _
    $region27: #{tpu_custom_call.1} parent=1 // pred_check_branch
      %92 = sbr.rel (0) target = $region29
    $region28: #{tpu_custom_call.1} parent=1 // pred_region
      %93 = dma.done [#allocation6], 256
    $region29: #{tpu_custom_call.1} parent=1 // pred_fallthru
      _
    // Predicated region
    $region30: #{tpu_custom_call.1} parent=1 // pred_check
      _
    $region31: #{tpu_custom_call.1} parent=1 // pred_check_branch
      %95 = sbr.rel (0) target = $region33
    $region32: #{tpu_custom_call.1} parent=1 // pred_region
      %96 = dma.done [#allocation9], 256
    $region33: #{tpu_custom_call.1} parent=1 // pred_fallthru
      _
    %s97 = sadd.s32 0, 0
    %p98 = scmp.lt.s32.totalorder %s97, 0
    %s99 = scalar_select %p98, %s97, 0
    %s100 = smul.u32 2, %s99
    %s101 = sadd.s32 0, 0
    %p102 = scmp.lt.s32.totalorder %s101, 0
    %s103 = scalar_select %p102, %s101, 0
    %s104 = smul.u32 2, %s103
    %s105 = sadd.s32 0, 0
    %p106 = scmp.lt.s32.totalorder %s105, 0
    %s107 = scalar_select %p106, %s105, 0
    %s108 = smul.u32 2, %s107
    %s109 = sadd.s32 0, 0
    %p110 = scmp.lt.s32.totalorder %s109, 0
    %s111 = scalar_select %p110, %s109, 0
    %s112 = smul.u32 2, %s111
    %p113 = scmp.eq.s32.totalorder 0, 0
    // Predicated region
    $region34: #{tpu_custom_call.1} parent=1 // pred_check
      %p114 = pneg %p113
    $region35: #{tpu_custom_call.1} parent=1 // pred_check_branch
      %116 = sbr.rel (%p114) target = $region37
    $region36: #{tpu_custom_call.1} parent=1 // pred_region
      %vm117 = vcmask 24576
      %118 = vst.msk [vmem:[#allocation10] sm:$0x1] %vm117, 0.0
    $region37: #{tpu_custom_call.1} parent=1 // pred_fallthru
      _
    %s119 = sadd.s32 0, 0
    %s120 = smul.u32 %s119, 16
    %v121 = vlaneseq
    %v122 = vshrl.u32 %v121, 7
    %v123 = vadd.s32 %v122, 8
    %v124 = vstv %s120
    %v125 = vadd.s32 %v124, %v122
    %v126 = vadd.s32 %v124, %v123
    %vm127 = vcmp.lt.s32.totalorder %v125, 16
    %vm128 = vcmp.lt.s32.totalorder %v126, 16
    %v129 = vld [vmem:[#allocation7] sm:$0xff]
    %v130 = vld [vmem:[#allocation7 + $0x8] sm:$0xff]
    %v131 = vld [vmem:[#allocation8] sm:$0xff]
    %v132 = vld [vmem:[#allocation8 + $0x8] sm:$0xff]
    %v133 = vsel %vm127, 1, 0
    %v134 = vsel %vm128, 1, 0
    %vm135 = vcmp.eq.s32.totalorder %v133, 1
    %vm136 = vcmp.eq.s32.totalorder %v134, 1
    %v137 = vsel %vm135, %v131, 0.0
    %v138 = vsel %vm136, %v132, 0.0
    %v139 = vld [vmem:[#allocation2] sm:$0xff]
    %v140 = vld [vmem:[#allocation2 + $0x8] sm:$0xff]
    %v141 = vlaneseq
    %v142 = vand.u32 %v141, 127
    %143 = vset.pattern.permute.xlu0 0
    %144 = vperm.xlu0 %143, %v129
    %v145 = vpop.permute.xlu0 %144
    %146 = vset.pattern.permute.xlu0 0
    %147 = vperm.xlu0 %146, %v130
    %v148 = vpop.permute.xlu0 %147
    %vm149 = vcmp.eq.s32.totalorder %v142, %v145
    %vm150 = vcmp.eq.s32.totalorder %v142, %v148
    %v151 = vsel %vm149, %v139, 0.0
    %v152 = vsel %vm150, %v140, 0.0
    %vm153 = vcmask 261120
    %v154 = vsel %vm153, %v151, 0.0
    %155 = vadd.xlane.f32.xlu0 %v154
    %v156 = vpop.xlane.xlu0 %155
    %v157 = vsel %vm153, %v152, 0.0
    %158 = vadd.xlane.f32.xlu0 %v157
    %v159 = vpop.xlane.xlu0 %158
    %v160 = vsel %vm127, %v156, 0.0
    %v161 = vsel %vm128, %v159, 0.0
    %v162 = vsub.f32 0.0, %v160
    %v163 = vsub.f32 0.0, %v161
    %v164 = vmul.f32 %v162, %v137
    %v165 = vmul.f32 %v163, %v138
    %vm166 = vcmask 7168
    %v167 = vsel %vm166, %v164, 0.0
    %v168 = vsel %vm166, %v165, 0.0
    %v169 = vadd.f32 %v167, %v168
    %170 = vadd.xlane.f32.xlu0 %v169
    %v171 = vpop.xlane.xlu0 %170
    %v172 = vrot.slane %v171, 4
    %v173 = vadd.f32 %v171, %v172
    %v174 = vrot.slane %v173, 2
    %v175 = vadd.f32 %v173, %v174
    %v176 = vrot.slane %v175, 1
    %v177 = vadd.f32 %v175, %v176
    %s178 = vtos %v177
    %v179 = vsel %vm166, %v137, 0.0
    %v180 = vsel %vm166, %v138, 0.0
    %v181 = vadd.f32 %v179, %v180
    %182 = vadd.xlane.f32.xlu0 %v181
    %v183 = vpop.xlane.xlu0 %182
    %v184 = vrot.slane %v183, 4
    %v185 = vadd.f32 %v183, %v184
    %v186 = vrot.slane %v185, 2
    %v187 = vadd.f32 %v185, %v186
    %v188 = vrot.slane %v187, 1
    %v189 = vadd.f32 %v187, %v188
    %s190 = vtos %v189
    %v191 = vld [vmem:[#allocation5] sm:$0xff]
    %v192 = vld [vmem:[#allocation5 + $0x8] sm:$0xff]
    %v193 = vsub.s32 %v129, 1
    %v194 = vsub.s32 %v130, 1
    %195 = vset.pattern.permute.xlu0 1
    %196 = vperm.xlu0 %195, %v193
    %v197 = vpop.permute.xlu0 %196
    %198 = vset.pattern.permute.xlu0 1
    %199 = vperm.xlu0 %198, %v194
    %v200 = vpop.permute.xlu0 %199
    %vm201 = vcmp.eq.s32.totalorder %v142, %v197
    %vm202 = vcmp.eq.s32.totalorder %v142, %v200
    %204 = vset.pattern.permute.xlu0 1
    %205 = vperm.xlu0 %204, %v137
    %v206 = vpop.permute.xlu0 %205
    %209 = vset.pattern.permute.xlu0 1
    %210 = vperm.xlu0 %209, %v138
    %v211 = vpop.permute.xlu0 %210
    %v213 = vsel %vm201, %v206, 0.0
    %v214 = vsel %vm202, %v211, 0.0
    %v215 = vadd.f32 %v213, 0.0
    %v216 = vadd.f32 %v214, 0.0
    %217 = vset.pattern.permute.xlu0 2
    %218 = vperm.xlu0 %217, %v193
    %v219 = vpop.permute.xlu0 %218
    %220 = vset.pattern.permute.xlu0 2
    %221 = vperm.xlu0 %220, %v194
    %v222 = vpop.permute.xlu0 %221
    %vm223 = vcmp.eq.s32.totalorder %v142, %v219
    %vm224 = vcmp.eq.s32.totalorder %v142, %v222
    %225 = vset.pattern.permute.xlu0 2
    %226 = vperm.xlu0 %225, %v137
    %v227 = vpop.permute.xlu0 %226
    %229 = vset.pattern.permute.xlu0 2
    %230 = vperm.xlu0 %229, %v138
    %v231 = vpop.permute.xlu0 %230
    %v233 = vsel %vm223, %v227, 0.0
    %v234 = vsel %vm224, %v231, 0.0
    %v235 = vadd.f32 %v215, %v233
    %v236 = vadd.f32 %v216, %v234
    %237 = vset.pattern.permute.xlu0 3
    %238 = vperm.xlu0 %237, %v193
    %v239 = vpop.permute.xlu0 %238
    %240 = vset.pattern.permute.xlu0 3
    %241 = vperm.xlu0 %240, %v194
    %v242 = vpop.permute.xlu0 %241
    %vm243 = vcmp.eq.s32.totalorder %v142, %v239
    %vm244 = vcmp.eq.s32.totalorder %v142, %v242
    %245 = vset.pattern.permute.xlu0 3
    %246 = vperm.xlu0 %245, %v137
    %v247 = vpop.permute.xlu0 %246
    %249 = vset.pattern.permute.xlu0 3
    %250 = vperm.xlu0 %249, %v138
    %v251 = vpop.permute.xlu0 %250
    %v253 = vsel %vm243, %v247, 0.0
    %v254 = vsel %vm244, %v251, 0.0
    %v255 = vadd.f32 %v235, %v253
    %v256 = vadd.f32 %v236, %v254
    %257 = vset.pattern.permute.xlu0 4
    %258 = vperm.xlu0 %257, %v193
    %v259 = vpop.permute.xlu0 %258
    %260 = vset.pattern.permute.xlu0 4
    %261 = vperm.xlu0 %260, %v194
    %v262 = vpop.permute.xlu0 %261
    %vm263 = vcmp.eq.s32.totalorder %v142, %v259
    %vm264 = vcmp.eq.s32.totalorder %v142, %v262
    %265 = vset.pattern.permute.xlu0 4
    %266 = vperm.xlu0 %265, %v137
    %v267 = vpop.permute.xlu0 %266
    %269 = vset.pattern.permute.xlu0 4
    %270 = vperm.xlu0 %269, %v138
    %v271 = vpop.permute.xlu0 %270
    %v273 = vsel %vm263, %v267, 0.0
    %v274 = vsel %vm264, %v271, 0.0
    %v275 = vadd.f32 %v255, %v273
    %v276 = vadd.f32 %v256, %v274
    %vm277 = vcmp.ne.f32.partialorder %v275, 0.0
    %vm278 = vcmp.ne.f32.partialorder %v276, 0.0
    %v279 = vsub.f32 0.0, %v191
    %v280 = vsub.f32 0.0, %v192
    %v281 = vmul.f32 %v279, %v275
    %v282 = vmul.f32 %v280, %v276
    %v283 = vsel %vm277, %v281, 0.0
    %v284 = vsel %vm278, %v282, 0.0
    %vm285 = vcmask 130048
    %v286 = vsel %vm285, %v283, 0.0
    %v287 = vsel %vm285, %v284, 0.0
    %v288 = vadd.f32 %v286, %v287
    %289 = vadd.xlane.f32.xlu0 %v288
    %v290 = vpop.xlane.xlu0 %289
    %v291 = vrot.slane %v290, 4
    %v292 = vadd.f32 %v290, %v291
    %v293 = vrot.slane %v292, 2
    %v294 = vadd.f32 %v292, %v293
    %v295 = vrot.slane %v294, 1
    %v296 = vadd.f32 %v294, %v295
    %s297 = vtos %v296
    %298 = vrot.lane.b32.xlu0 %v137, 127
    %v299 = vpop.permute.xlu0 %298
    %300 = vrot.lane.b32.xlu0 %v138, 127
    %v301 = vpop.permute.xlu0 %300
    %vm304 = vcmask 31744
    %v305 = vsel %vm304, %v299, 0.0
    %306 = vadd.xlane.f32.xlu0 %v305
    %v307 = vpop.xlane.xlu0 %306
    %v308 = vsel %vm304, %v301, 0.0
    %309 = vadd.xlane.f32.xlu0 %v308
    %v310 = vpop.xlane.xlu0 %309
    %vm311 = vcmp.ne.f32.partialorder %v307, 0.0
    %vm312 = vcmp.ne.f32.partialorder %v310, 0.0
    %v313 = vsel %vm311, 1, 0
    %v314 = vsel %vm312, 1, 0
    %v315 = vcvt.s32.f32 %v313
    %v316 = vcvt.s32.f32 %v314
    %v317 = vsel %vm166, %v315, 0.0
    %v318 = vsel %vm166, %v316, 0.0
    %v319 = vadd.f32 %v317, %v318
    %320 = vadd.xlane.f32.xlu0 %v319
    %v321 = vpop.xlane.xlu0 %320
    %v322 = vrot.slane %v321, 4
    %v323 = vadd.f32 %v321, %v322
    %v324 = vrot.slane %v323, 2
    %v325 = vadd.f32 %v323, %v324
    %v326 = vrot.slane %v325, 1
    %v327 = vadd.f32 %v325, %v326
    %s328 = vtos %v327
    %v329 = vld [vmem:[#allocation10] sm:$0x1]
    %vm330 = vcmp.eq.s32.totalorder %v142, 0
    %v331 = vstv %s178
    %v332 = vsel %vm330, %v331, 0.0
    %vm333 = vcmp.eq.s32.totalorder %v142, 1
    %v334 = vstv %s190
    %v335 = vsel %vm333, %v334, 0.0
    %v336 = vadd.f32 %v332, %v335
    %vm337 = vcmp.eq.s32.totalorder %v142, 2
    %v338 = vstv %s297
    %v339 = vsel %vm337, %v338, 0.0
    %v340 = vadd.f32 %v336, %v339
    %vm341 = vcmp.eq.s32.totalorder %v142, 3
    %v342 = vstv %s328
    %v343 = vsel %vm341, %v342, 0.0
    %v344 = vadd.f32 %v340, %v343
    %v345 = vadd.f32 %v329, %v344
    %vm346 = vcmask 24576
    %347 = vst.msk [vmem:[#allocation10] sm:$0x1] %vm346, %v345
    // Predicated region
    $region38: #{tpu_custom_call.1} parent=1 // pred_check
      _
    $region39: #{tpu_custom_call.1} parent=1 // pred_check_branch
      %349 = sbr.rel (0) target = $region41
    $region40: #{tpu_custom_call.1} parent=1 // pred_region
      %s351 = ssub.s32 16, 16
      %352 = vsyncadd [#allocation4], %s351
      %s354 = sshll.u32 [#allocation10], 4
      %s355 = int_to_ptr.vmem [resolvable:$true] %s354
      %357 = dma.vmem_to_hbm [thread:$0]  %s355, 16, %s4, [#allocation4]
    $region41: #{tpu_custom_call.1} parent=1 // pred_fallthru
      _
    // Predicated region
    $region42: #{tpu_custom_call.1} parent=1 // pred_check
      _
    $region43: #{tpu_custom_call.1} parent=1 // pred_check_branch
      %359 = sbr.rel (0) target = $region45
    $region44: #{tpu_custom_call.1} parent=1 // pred_region
      %360 = dma.done [#allocation4], 16
    $region45: #{tpu_custom_call.1} parent=1 // pred_fallthru
      _
    %361 = vsyncpa [#allocation3], 1
    %362 = vsyncpa [#allocation6], 1
    %363 = vsyncpa [#allocation9], 1
    %364 = vsyncpa [#allocation4], 1

</llo_original>
